<compile_context>
chip_gen: v7x
topology: tpu7x:2x2x1
jax: 0.10.0
libtpu: 0.0.40
codegen_flags: <defaults>
</compile_context>

<pallas_src>
import functools

import jax
import jax.numpy as jnp
from jax import lax
from jax.experimental import pallas as pl
from jax.experimental.pallas import tpu as pltpu


# ----------------------------------------------------------------------------
# Generic tiled streaming sum reduction
# ----------------------------------------------------------------------------

_LANES = 128
_TILE_ROWS = 4096      # (4096, 128) f32 block = 2 MiB per buffer.
_NUM_SLICES = 2        # outer "parallel" axis -> both TensorCores on v7x.


def _sq_diff(a, b):
    d = a - b
    return d * d


def _masked_sq_diff(p, g, m):
    d = (p - g) * m
    return d * d


def _sq(p):
    return p * p


def _make_reduce_kernel(n_inputs, combine, rows, tile_rows, tiles_per_core,
                        needs_mask):
    """Kernel: per tile, accumulate combine(*inputs) into an (8,128) VMEM acc."""

    def kernel(*refs):
        in_refs = refs[:n_inputs]
        out_ref = refs[n_inputs]
        acc_ref = refs[n_inputs + 1]

        c = pl.program_id(0)      # core-slice ("parallel")
        i = pl.program_id(1)      # tile within slice ("arbitrary")

        @pl.when(i == 0)
        def _():
            acc_ref[...] = jnp.zeros_like(acc_ref)

        # Widen AFTER the (possibly narrow-dtype) DMA — no extra HBM traffic.
        vals = [r[...].astype(jnp.float32) for r in in_refs]
        dd = combine(*vals)

        if needs_mask:
            # Zero rows past the logical end: ragged last tile and/or the
            # clamped duplicate tile on the second core slice.
            t = c * tiles_per_core + i
            row_ids = lax.broadcasted_iota(jnp.int32, dd.shape, 0) + t * tile_rows
            dd = jnp.where(row_ids < rows, dd, jnp.float32(0.0))

        if tile_rows % 8 == 0:
            # Pure VPU vreg adds; no per-tile cross-lane (XLU) reduce.
            acc_ref[...] += dd.reshape(-1, 8, _LANES).sum(axis=0)
        else:
            # Tiny single-tile case (rows < 8*k): one cheap sublane reduce.
            acc_ref[0:1, :] += jnp.sum(dd, axis=0, keepdims=True)

        @pl.when(i == pl.num_programs(1) - 1)
        def _():
            out_ref[0, 0] = jnp.sum(acc_ref[...])

    return kernel


def _to_slab(x):
    """Flatten to a lane-dense (rows, 128) slab. Only pads when n % 128 != 0."""
    flat = x.reshape(-1)
    rem = flat.shape[0] % _LANES
    if rem:
        # TODO(synk): tail pad copies the array; only hit when n % 128 != 0.
        flat = jnp.pad(flat, (0, _LANES - rem))
    return flat.reshape(-1, _LANES)


def _tiled_sum_reduce(combine, arrays):
    """Stream the flattened inputs through `combine`, returning the f32 sum."""
    slabs = [_to_slab(a) for a in arrays]
    rows = slabs[0].shape[0]

    if rows <= _TILE_ROWS:
        tile_rows, num_tiles = rows, 1      # full-dims block: always legal
    else:
        tile_rows, num_tiles = _TILE_ROWS, pl.cdiv(rows, _TILE_ROWS)

    num_slices = _NUM_SLICES if num_tiles > 1 else 1
    tiles_per_core = pl.cdiv(num_tiles, num_slices)
    needs_mask = (num_slices * tiles_per_core * tile_rows) != rows

    kernel = _make_reduce_kernel(len(slabs), combine, rows, tile_rows,
                                 tiles_per_core, needs_mask)

    def in_idx(c, i):
        # Clamp so the block start never runs past the slab; the duplicate
        # (clamped) tile is fully zeroed by the in-kernel row mask.
        return (jnp.minimum(c * tiles_per_core + i, num_tiles - 1), 0)

    in_bytes = sum(2 * tile_rows * _LANES * s.dtype.itemsize for s in slabs)
    vmem_limit = int(max(16 << 20, 2 * in_bytes + (8 << 20)))

    out = pl.pallas_call(
        kernel,
        out_shape=jax.ShapeDtypeStruct((num_slices, 1), jnp.float32),
        grid=(num_slices, tiles_per_core),
        in_specs=[pl.BlockSpec((tile_rows, _LANES), in_idx)] * len(slabs),
        out_specs=pl.BlockSpec((1, 1), lambda c, i: (c, 0),
                               memory_space=pltpu.SMEM),
        scratch_shapes=[pltpu.VMEM((8, _LANES), jnp.float32)],
        compiler_params=pltpu.CompilerParams(
            dimension_semantics=("parallel", "arbitrary"),
            vmem_limit_bytes=vmem_limit),
    )(*slabs)
    return jnp.sum(out)


def mse_loss_pallas(a, b):
    s = _tiled_sum_reduce(_sq_diff, [a, b])
    return s / a.size                       # original (unpadded) element count


def masked_mse_loss_pallas(pred, gt, mask):
    if mask.dtype == jnp.bool_:
        mask = mask.astype(jnp.uint8)       # narrow dtype end-to-end
    s = _tiled_sum_reduce(_masked_sq_diff, [pred, gt, mask])
    return s / pred.size


def sum_of_squares_pallas(params):
    """L2 regularization: per-parameter streaming reductions (no concat copy)."""
    params = list(params)
    if not params:
        return jnp.float32(0.0)
    total = jnp.float32(0.0)
    for p in params:
        total = total + _tiled_sum_reduce(_sq, [p])
    return total


# ----------------------------------------------------------------------------
# CLIP contrastive loss (row-tiled over the image-feature batch)
# ----------------------------------------------------------------------------

_CLIP_SINGLE_BLOCK_MAX_B = 1024
_CLIP_ROW_BLOCK = 256


def _clip_loss_kernel(img_ref, txt_all_ref, txt_blk_ref, out_ref, *,
                      batch, tile_b, temperature, needs_mask):
    i = pl.program_id(0)

    @pl.when(i == 0)
    def _():
        out_ref[0, 0] = jnp.float32(0.0)

    inv_t = jnp.float32(1.0 / temperature)
    img = img_ref[...]                                        # (tile_b, d)
    # similarity block = img_block @ txt.T / T — contract last dims directly
    # (no materialized transpose); MXU accumulates in f32.
    sim = lax.dot_general(img, txt_all_ref[...],
                          dimension_numbers=(((1,), (1,)), ((), ())),
                          preferred_element_type=jnp.float32) * inv_t
    # diag(sim) for this row block via rowwise multiply-reduce against the
    # matching text rows (second, row-tiled text stream) — O(tile_b * d).
    diag = jnp.sum(img.astype(jnp.float32) * txt_blk_ref[...].astype(jnp.float32),
                   axis=-1, keepdims=True) * inv_t
    m = jnp.max(sim, axis=-1, keepdims=True)
    lse = m + jnp.log(jnp.sum(jnp.exp(sim - m), axis=-1, keepdims=True))
    # cross_entropy(sim, arange(b)) = mean_i( logsumexp(sim[i]) - sim[i, i] )
    contrib = lse - diag                                      # (tile_b, 1)
    if needs_mask:
        row_ids = lax.broadcasted_iota(jnp.int32, contrib.shape, 0) + i * tile_b
        contrib = jnp.where(row_ids < batch, contrib, jnp.float32(0.0))
    out_ref[0, 0] += jnp.sum(contrib)


def clip_loss_pallas(image_features, text_features, temperature):
    b, d = image_features.shape
    if b <= _CLIP_SINGLE_BLOCK_MAX_B:
        tile_b, n_blocks = b, 1
    else:
        tile_b = _CLIP_ROW_BLOCK
        n_blocks = pl.cdiv(b, tile_b)
    needs_mask = (n_blocks * tile_b) != b

    kernel = functools.partial(_clip_loss_kernel, batch=b, tile_b=tile_b,
                               temperature=float(temperature),
                               needs_mask=needs_mask)
    out = pl.pallas_call(
        kernel,
        out_shape=jax.ShapeDtypeStruct((1, 1), jnp.float32),
        grid=(n_blocks,),
        in_specs=[pl.BlockSpec((tile_b, d), lambda i: (i, 0)),   # img row block
                  pl.BlockSpec((b, d), lambda i: (0, 0)),        # txt resident
                  pl.BlockSpec((tile_b, d), lambda i: (i, 0))],  # txt row block
        out_specs=pl.BlockSpec((1, 1), lambda i: (0, 0),
                               memory_space=pltpu.SMEM),
        compiler_params=pltpu.CompilerParams(
            dimension_semantics=("arbitrary",)),
    )(image_features, text_features, text_features)
    return out[0, 0] / b


# ----------------------------------------------------------------------------
# CombinedLoss (JAX / Pallas port of CombinedLoss_)
# ----------------------------------------------------------------------------

class CombinedLoss:
    def __init__(self, cfg=None):
        cfg = cfg or {}
        self.lambda_depth = cfg.get('lambda_depth', 0.5)
        self.lambda_clip = cfg.get('lambda_clip', 0.3)
        self.lambda_edge = cfg.get('lambda_edge', 0.2)
        self.lambda_reg = cfg.get('lambda_reg', 0.01)
        self.lambda_lap = cfg.get('lambda_lap', 0.1)
        self.beta_grad = cfg.get('beta_grad', 0.05)
        self.temperature = cfg.get('temperature', 0.07)
        self.render_size = cfg.get('render_size', 128)
        # Kept for API parity only; the dispatch below never mutates it
        # (mutating self under jit/tracing is unsafe).
        self.simplified = True

    def __call__(self, *args):
        if len(args) == 2 and isinstance(args[0], dict) and isinstance(args[1], dict):
            return self._forward_full(args[0], args[1])
        elif len(args) == 2:
            return self._forward_simplified(args[0], args[1])
        else:
            raise ValueError(f'Unsupported arguments: {args}')

    # -- simplified: RGB reconstruction MSE ----------------------------------
    def _forward_simplified(self, rendered_images, target_images):
        if tuple(target_images.shape) != tuple(rendered_images.shape):
            # F.interpolate(mode='bilinear', align_corners=False) equivalent
            target_images = jax.image.resize(
                target_images, rendered_images.shape,
                method='bilinear', antialias=False)
        rgb_loss = mse_loss_pallas(rendered_images, target_images)
        return {'total': rgb_loss, 'rgb': rgb_loss}

    # -- full -----------------------------------------------------------------
    def _forward_full(self, outputs, targets):
        depth_loss = masked_mse_loss_pallas(
            outputs['pred_depth'], targets['gt_depth'], targets['visibility_mask'])
        clip_loss = clip_loss_pallas(
            outputs['image_features'], targets['text_features'], self.temperature)
        # TODO(synk): EdgeAwareLoss source not provided; edge term fixed to 0.
        edge_loss = jnp.float32(0.0)
        reg_loss = sum_of_squares_pallas(outputs['model_params'])
        total_loss = (self.lambda_depth * depth_loss
                      + self.lambda_clip * clip_loss
                      + self.lambda_edge * edge_loss
                      + self.lambda_reg * reg_loss)
        return {'total': total_loss, 'depth': depth_loss, 'clip': clip_loss,
                'edge': edge_loss, 'reg': reg_loss}


# ----------------------------------------------------------------------------
# Demo / smoke test
# ----------------------------------------------------------------------------

if __name__ == "__main__":
    key = jax.random.PRNGKey(0)
    k1, k2, k3, k4, k5, k6, k7, k8, k9, k10 = jax.random.split(key, 10)

    loss_fn = CombinedLoss({})

    # --- simplified path: rendered [B,3,H,W], target at a different size ----
    rendered = jax.random.normal(k1, (2, 3, 16, 16), dtype=jnp.float32)
    target = jax.random.normal(k2, (2, 3, 32, 32), dtype=jnp.float32)
    simplified_out = loss_fn(rendered, target)
    jax.block_until_ready(simplified_out['total'])

    # reference check (plain JAX)
    tgt_r = jax.image.resize(target, rendered.shape, method='bilinear', antialias=False)
    ref_rgb = jnp.mean((rendered - tgt_r) ** 2)
    assert jnp.allclose(simplified_out['rgb'], ref_rgb, rtol=1e-5, atol=1e-5)

    # --- full path -----------------------------------------------------------
    pred_depth = jax.random.normal(k3, (2, 1, 16, 16), dtype=jnp.float32)
    gt_depth = jax.random.normal(k4, (2, 1, 16, 16), dtype=jnp.float32)
    vis_mask = (jax.random.uniform(k5, (2, 1, 16, 16)) > 0.5).astype(jnp.float32)
    image_features = jax.random.normal(k6, (2, 32), dtype=jnp.float32)
    text_features = jax.random.normal(k7, (2, 32), dtype=jnp.float32)
    model_params = [
        jax.random.normal(k8, (32, 32), dtype=jnp.float32) * 0.02,
        jnp.ones((16,), dtype=jnp.float32) * 0.1,
    ]
    outputs = {
        'pred_depth': pred_depth,
        'rendered_images': rendered,
        'image_features': image_features,
        'pred_mesh': None,
        'model_params': model_params,
    }
    targets = {
        'gt_depth': gt_depth,
        'visibility_mask': vis_mask,
        'text_features': text_features,
    }
    full_out = loss_fn(outputs, targets)
    jax.block_until_ready(full_out['total'])

    # reference checks (plain JAX)
    ref_depth = jnp.mean(((pred_depth - gt_depth) * vis_mask) ** 2)
    sim = image_features @ text_features.T / 0.07
    diag = jnp.sum(image_features * text_features, axis=-1) / 0.07
    ref_clip = jnp.mean(jax.nn.logsumexp(sim, axis=-1) - diag)
    ref_reg = sum(jnp.sum(p ** 2) for p in model_params)
    assert jnp.allclose(full_out['depth'], ref_depth, rtol=1e-5, atol=1e-5)
    assert jnp.allclose(full_out['clip'], ref_clip, rtol=1e-3, atol=1e-3)
    assert jnp.allclose(full_out['reg'], ref_reg, rtol=1e-5, atol=1e-5)

    # --- coverage: multi-tile / ragged / 2-slice streaming reduction --------
    big_a = jax.random.normal(k9, (2, 3, 500, 500), dtype=jnp.float32)
    big_b = jax.random.normal(k10, (2, 3, 500, 500), dtype=jnp.float32)
    big_mse = mse_loss_pallas(big_a, big_b)
    jax.block_until_ready(big_mse)
    ref_big = jnp.mean((big_a - big_b) ** 2)
    assert jnp.allclose(big_mse, ref_big, rtol=1e-4, atol=1e-4)

    print("KERNEL_OK")
</pallas_src>

<mosaic_0001>
module attributes {stable_mosaic.version = 11 : i64} {
  func.func @kernel(%arg0: i32, %arg1: i32, %arg2: memref<12x128xf32, #tpu.memory_space<vmem>>, %arg3: memref<12x128xf32, #tpu.memory_space<vmem>>, %arg4: memref<1x1xf32, #tpu.memory_space<smem>>, %arg5: memref<8x128xf32, #tpu.memory_space<vmem>>) attributes {dimension_semantics = [#tpu.dimension_semantics<parallel>, #tpu.dimension_semantics<arbitrary>], iteration_bounds = array<i64: 1, 1>, scalar_prefetch = 0 : i64, scratch_operands = 1 : i64, tpu.core_type = #tpu.core_type<tc>, window_params = [{transform_indices = @transform_0, window_bounds = array<i64: 12, 128>}, {transform_indices = @transform_1, window_bounds = array<i64: 12, 128>}, {transform_indices = @transform_2, window_bounds = array<i64: 1, 1>}]} {
    %c0_i32 = arith.constant 0 : i32
    %0 = arith.cmpi eq, %arg1, %c0_i32 : i32
    %1 = arith.extui %0 : i1 to i32
    %c0_i32_0 = arith.constant 0 : i32
    %2 = arith.cmpi ne, %1, %c0_i32_0 : i32
    scf.if %2 {
      %cst_10 = arith.constant 0.000000e+00 : f32
      %15 = vector.broadcast %cst_10 : f32 to vector<8x128xf32>
      %c0_11 = arith.constant 0 : index
      %c0_12 = arith.constant 0 : index
      %16 = vector.load %arg5[%c0_11, %c0_12] : memref<8x128xf32, #tpu.memory_space<vmem>>, vector<8x128xf32>
      tpu.vector_store %arg5[%c0_11, %c0_12], %15 {strides = array<i32>} : memref<8x128xf32, #tpu.memory_space<vmem>>, vector<8x128xf32>,
    } else {
    }
    %c0 = arith.constant 0 : index
    %c0_1 = arith.constant 0 : index
    %3 = vector.load %arg2[%c0, %c0_1] : memref<12x128xf32, #tpu.memory_space<vmem>>, vector<12x128xf32>
    %c0_2 = arith.constant 0 : index
    %c0_3 = arith.constant 0 : index
    %4 = vector.load %arg3[%c0_2, %c0_3] : memref<12x128xf32, #tpu.memory_space<vmem>>, vector<12x128xf32>
    %5 = arith.subf %3, %4 : vector<12x128xf32>
    %6 = arith.mulf %5, %5 : vector<12x128xf32>
    %c0_4 = arith.constant 0 : index
    %c0_5 = arith.constant 0 : index
    %7 = vector.load %arg5[%c0_4, %c0_5] : memref<8x128xf32, #tpu.memory_space<vmem>>, vector<1x128xf32>
    %cst = arith.constant dense<0.000000e+00> : vector<128xf32>
    %8 = vector.multi_reduction <add>, %6, %cst [0] : vector<12x128xf32> to vector<128xf32>
    %9 = vector.shape_cast %8 : vector<128xf32> to vector<1x128xf32>
    %10 = arith.addf %7, %9 : vector<1x128xf32>
    %c0_6 = arith.constant 0 : index
    %c0_7 = arith.constant 0 : index
    %11 = vector.load %arg5[%c0_6, %c0_7] : memref<8x128xf32, #tpu.memory_space<vmem>>, vector<1x128xf32>
    tpu.vector_store %arg5[%c0_6, %c0_7], %10 {strides = array<i32>} : memref<8x128xf32, #tpu.memory_space<vmem>>, vector<1x128xf32>,
    %c0_i32_8 = arith.constant 0 : i32
    %12 = arith.cmpi eq, %arg1, %c0_i32_8 : i32
    %13 = arith.extui %12 : i1 to i32
    %c0_i32_9 = arith.constant 0 : i32
    %14 = arith.cmpi ne, %13, %c0_i32_9 : i32
    scf.if %14 {
      %c0_10 = arith.constant 0 : index
      %c0_11 = arith.constant 0 : index
      %15 = vector.load %arg5[%c0_10, %c0_11] : memref<8x128xf32, #tpu.memory_space<vmem>>, vector<8x128xf32>
      %16 = vector.shape_cast %15 : vector<8x128xf32> to vector<1x8x128xf32>
      %cst_12 = arith.constant dense<0.000000e+00> : vector<1xf32>
      %17 = vector.multi_reduction <add>, %16, %cst_12 [1, 2] : vector<1x8x128xf32> to vector<1xf32>
      %18 = vector.shape_cast %17 : vector<1xf32> to vector<1x1x1xf32>
      %19 = vector.extract %18[0, 0, 0] : f32 from vector<1x1x1xf32>
      %c0_13 = arith.constant 0 : index
      %c0_14 = arith.constant 0 : index
      %20 = memref.load %arg4[%c0_13, %c0_14] : memref<1x1xf32, #tpu.memory_space<smem>>
      memref.store %19, %arg4[%c0_13, %c0_14] : memref<1x1xf32, #tpu.memory_space<smem>>
    } else {
    }
    return
  }
  func.func @transform_0(%arg0: i32, %arg1: i32) -> (i32, i32) {
    %c1_i32 = arith.constant 1 : i32
    %0 = arith.muli %arg0, %c1_i32 : i32
    %1 = arith.addi %0, %arg1 : i32
    %c0_i32 = arith.constant 0 : i32
    %2 = arith.minsi %1, %c0_i32 : i32
    %c0_i32_0 = arith.constant 0 : i32
    %c0_i32_1 = arith.constant 0 : i32
    return %2, %c0_i32_0 : i32, i32
  }
  func.func @transform_1(%arg0: i32, %arg1: i32) -> (i32, i32) {
    %c1_i32 = arith.constant 1 : i32
    %0 = arith.muli %arg0, %c1_i32 : i32
    %1 = arith.addi %0, %arg1 : i32
    %c0_i32 = arith.constant 0 : i32
    %2 = arith.minsi %1, %c0_i32 : i32
    %c0_i32_0 = arith.constant 0 : i32
    %c0_i32_1 = arith.constant 0 : i32
    return %2, %c0_i32_0 : i32, i32
  }
  func.func @transform_2(%arg0: i32, %arg1: i32) -> (i32, i32) {
    %c0_i32 = arith.constant 0 : i32
    %c0_i32_0 = arith.constant 0 : i32
    return %arg0, %c0_i32 : i32, i32
  }
}

</mosaic_0001>

<llo_original>
// kernel: tpu_custom_call.1
$region0: #{tpu_custom_call.1}
  #allocation0 [shape = 'u32[]', space=smem, size = 0x4, offset = 0x4, fixed_abs, tag = 'smem constant byte address 0x4 - core index']
  #allocation1 [shape = 'u32[144,128]{1,0:T(1,128)}', space=vmem, size = 0x12000, scoped, tag = 'internal scratch']
  #allocation2 [shape = 'f32[8,128]{1,0:T(8,128)}', space=vmem, size = 0x1000, scoped, tag = 'scratch operand']
  %s0 = inlined_call_operand.hbm [shape: f32[12,128], index: 0, kind: input, shape index: {}]
  %s1 = inlined_call_operand.hbm [shape: f32[12,128], index: 1, kind: input, shape index: {}]
  %s2 = inlined_call_operand.hbm [shape: f32[1,1], index: 2, kind: output, shape index: {}]
  %s3 = sld [smem:[#allocation0]]
  $region34: #{tpu_custom_call.1} parent=0
    _
  %s5 = ssub.s32 1, %s3
  %s6 = scalar_select 0, %s5, %s3
  $region1: #{tpu_custom_call.1} parent=0
    #allocation3 [shape = 'u8[8192]{0}', space=vmem, size = 0x2000, scoped, tag = 'input window, operand 0, single buffered']
    #allocation4 [shape = 's32[1]{0}', space=sflag, size = 0x4, scoped, tag = 'scoped memory for tpu_custom_call.1']
    #allocation5 [shape = 's32[1]{0}', space=sflag, size = 0x4, scoped, tag = 'scoped memory for tpu_custom_call.1']
    #allocation6 [shape = 'u8[8192]{0}', space=vmem, size = 0x2000, scoped, tag = 'input window, operand 1, single buffered']
    #allocation7 [shape = 's32[1]{0}', space=sflag, size = 0x4, scoped, tag = 'scoped memory for tpu_custom_call.1']
    #allocation8 [shape = 'u8[512]{0}', space=smem, size = 0x200, scoped, tag = 'output window, operand 0, single buffered']
    %7 = vsyncpa [#allocation4], 0
    %8 = vsyncpa [#allocation7], 0
    %9 = vsyncpa [#allocation5], 0
    // Predicated region
    $region2: #{tpu_custom_call.1} parent=1 // pred_check
      _
    $region3: #{tpu_custom_call.1} parent=1 // pred_check_branch
      %11 = sbr.rel (0) target = $region5
    $region4: #{tpu_custom_call.1} parent=1 // pred_region
      %s12 = sadd.s32 0, 0
      %p13 = scmp.lt.s32.totalorder %s12, 0
      %s14 = scalar_select %p13, %s12, 0
      %s15 = smul.u32 2, %s14
      %s17 = ssub.s32 256, 256
      %18 = vsyncadd [#allocation4], %s17
      %s19 = smul.addr %s15, 128
      %s20 = scalar_lea.hbm %s0, %s19
      %s21 = sshll.u32 [#allocation3], 4
      %s22 = int_to_ptr.vmem [resolvable:$true] %s21
      %27 = dma.hbm_to_vmem [thread:$0]  %s20, 256, %s22, [#allocation4], 128, 128, 8
    $region5: #{tpu_custom_call.1} parent=1 // pred_fallthru
      _
    // Predicated region
    $region6: #{tpu_custom_call.1} parent=1 // pred_check
      _
    $region7: #{tpu_custom_call.1} parent=1 // pred_check_branch
      %29 = sbr.rel (0) target = $region9
    $region8: #{tpu_custom_call.1} parent=1 // pred_region
      %s30 = sadd.s32 0, 0
      %p31 = scmp.lt.s32.totalorder %s30, 0
      %s32 = scalar_select %p31, %s30, 0
      %s33 = smul.u32 2, %s32
      %s35 = ssub.s32 256, 256
      %36 = vsyncadd [#allocation7], %s35
      %s37 = smul.addr %s33, 128
      %s38 = scalar_lea.hbm %s1, %s37
      %s39 = sshll.u32 [#allocation6], 4
      %s40 = int_to_ptr.vmem [resolvable:$true] %s39
      %45 = dma.hbm_to_vmem [thread:$0]  %s38, 256, %s40, [#allocation7], 128, 128, 8
    $region9: #{tpu_custom_call.1} parent=1 // pred_fallthru
      _
    // Predicated region
    $region10: #{tpu_custom_call.1} parent=1 // pred_check
      _
    $region11: #{tpu_custom_call.1} parent=1 // pred_check_branch
      %47 = sbr.rel (0) target = $region13
    $region12: #{tpu_custom_call.1} parent=1 // pred_region
      %48 = dma.done [#allocation4], 256
    $region13: #{tpu_custom_call.1} parent=1 // pred_fallthru
      _
    // Predicated region
    $region14: #{tpu_custom_call.1} parent=1 // pred_check
      _
    $region15: #{tpu_custom_call.1} parent=1 // pred_check_branch
      %50 = sbr.rel (0) target = $region17
    $region16: #{tpu_custom_call.1} parent=1 // pred_region
      %51 = dma.done [#allocation7], 256
    $region17: #{tpu_custom_call.1} parent=1 // pred_fallthru
      _
    %s52 = sadd.s32 0, 0
    %p53 = scmp.lt.s32.totalorder %s52, 0
    %s54 = scalar_select %p53, %s52, 0
    %s55 = smul.u32 2, %s54
    %s56 = sadd.s32 0, 0
    %p57 = scmp.lt.s32.totalorder %s56, 0
    %s58 = scalar_select %p57, %s56, 0
    %s59 = smul.u32 2, %s58
    %p60 = scmp.eq.s32.totalorder 0, 0
    // Predicated region
    $region18: #{tpu_custom_call.1} parent=1 // pred_check
      %p61 = pneg %p60
    $region19: #{tpu_custom_call.1} parent=1 // pred_check_branch
      %63 = sbr.rel (%p61) target = $region21
    $region20: #{tpu_custom_call.1} parent=1 // pred_region
      %64 = vst [vmem:[#allocation2] sm:$0xff] 0.0
    $region21: #{tpu_custom_call.1} parent=1 // pred_fallthru
      _
    %v65 = vld [vmem:[#allocation3] sm:$0xff]
    %v66 = vld [vmem:[#allocation3 + $0x8] sm:$0xf]
    %v67 = vld [vmem:[#allocation6] sm:$0xff]
    %v68 = vld [vmem:[#allocation6 + $0x8] sm:$0xf]
    %v69 = vsub.f32 %v65, %v67
    %v70 = vsub.f32 %v66, %v68
    %v71 = vmul.f32 %v69, %v69
    %v72 = vmul.f32 %v70, %v70
    %v73 = vld [vmem:[#allocation2] sm:$0x1]
    %vm74 = vcmask 1043456
    %v75 = vsel %vm74, %v72, 0.0
    %v76 = vadd.f32 %v71, %v75
    %v77 = vrot.slane %v76, 4
    %v78 = vadd.f32 %v76, %v77
    %v79 = vrot.slane %v78, 2
    %v80 = vadd.f32 %v78, %v79
    %v81 = vrot.slane %v80, 1
    %v82 = vadd.f32 %v80, %v81
    %v83 = vadd.f32 %v73, %v82
    %84 = vst [vmem:[#allocation2] sm:$0x1] %v83
    // Predicated region
    $region22: #{tpu_custom_call.1} parent=1 // pred_check
      %p85 = pneg %p60
    $region23: #{tpu_custom_call.1} parent=1 // pred_check_branch
      %87 = sbr.rel (%p85) target = $region25
    $region24: #{tpu_custom_call.1} parent=1 // pred_region
      %v88 = vld [vmem:[#allocation2] sm:$0xff]
      %89 = vadd.xlane.f32.xlu0 %v88
      %v90 = vpop.xlane.xlu0 %89
      %v91 = vrot.slane %v90, 4
      %v92 = vadd.f32 %v90, %v91
      %v93 = vrot.slane %v92, 2
      %v94 = vadd.f32 %v92, %v93
      %v95 = vrot.slane %v94, 1
      %v96 = vadd.f32 %v94, %v95
      %s97 = vtos %v96
      %s98 = scalar_lea.smem [#allocation8], 0
      %99 = sst [smem:[%s98]] %s97
    $region25: #{tpu_custom_call.1} parent=1 // pred_fallthru
      _
    // Predicated region
    $region26: #{tpu_custom_call.1} parent=1 // pred_check
      _
    $region27: #{tpu_custom_call.1} parent=1 // pred_check_branch
      %101 = sbr.rel (0) target = $region29
    $region28: #{tpu_custom_call.1} parent=1 // pred_region
      %s103 = ssub.s32 16, 16
      %104 = vsyncadd [#allocation5], %s103
      %107 = dma.smem_to_hbm [#allocation8], 16, %s2, [#allocation5]
    $region29: #{tpu_custom_call.1} parent=1 // pred_fallthru
      _
    // Predicated region
    $region30: #{tpu_custom_call.1} parent=1 // pred_check
      _
    $region31: #{tpu_custom_call.1} parent=1 // pred_check_branch
      %109 = sbr.rel (0) target = $region33
    $region32: #{tpu_custom_call.1} parent=1 // pred_region
      %110 = dma.done [#allocation5], 16
    $region33: #{tpu_custom_call.1} parent=1 // pred_fallthru
      _
    %111 = sfence
    %112 = vsyncpa [#allocation4], 1
    %113 = vsyncpa [#allocation7], 1
    %114 = vsyncpa [#allocation5], 1

</llo_original>
